<compile_context>
chip_gen: v5e
topology: v5e:2x2
jax: 0.10.0
libtpu: 0.0.40
codegen_flags: <defaults>
</compile_context>

<pallas_src>
import functools
import math

import jax
import jax.numpy as jnp
import numpy as np
from jax import lax
from jax.experimental import pallas as pl
from jax.experimental.pallas import tpu as pltpu


# ----------------------------- Pallas kernel -----------------------------

def _self_attn_kernel(x_ref, wkv_ref, bkv_ref, ww_ref, bw_ref, p_ref, o_ref,
                      *, key_channels, valid_s, approx_recip):
    """One batch element per grid step; everything channel-major (C, HW).

    x_ref   : (1, Cin, HW)    input, compute dtype (bf16 or f32)
    wkv_ref : (Ck+Cv, Cin)    fused [f_key/f_query ; f_value] weights (BN folded)
    bkv_ref : (Ck+Cv, 1)      fused biases, f32
    ww_ref  : (Cout, Cv)      output 1x1 conv weight (channel-major)
    bw_ref  : (Cout, 1)       output bias, f32
    p_ref   : (HW, S_pad)     PSP adaptive-avg-pool matrix, zero-padded cols
    o_ref   : (1, Cout, HW)   output, f32 (lane-dense: HW on the lane axis)
    """
    f32 = jnp.float32
    mxu_dt = x_ref.dtype                     # MXU operand dtype (bf16 or f32)

    xT = x_ref[0]                                                     # (Cin, HW)

    # Fused f_key/f_query + f_value 1x1 convs: one MXU pass, f32 accumulation.
    kvT = jnp.dot(wkv_ref[...], xT, preferred_element_type=f32)       # (Ck+Cv, HW)
    kvT = kvT + bkv_ref[...]

    # BN already folded into the key rows; ReLU applies only to the key rows.
    row = lax.broadcasted_iota(jnp.int32, (kvT.shape[0], 1), 0)
    kvT = jnp.where(row < key_channels, jnp.maximum(kvT, 0.0), kvT)

    # Fused PSP pooling of key and value: one (Ck+Cv, HW) @ (HW, S_pad) matmul.
    kv_lo = kvT.astype(mxu_dt)
    kv_psp = jnp.dot(kv_lo, p_ref[...], preferred_element_type=f32)   # (Ck+Cv, S_pad)

    qkT_lo = kv_lo[:key_channels]                                     # (Ck, HW)
    key_psp_t = jnp.transpose(kv_psp[:key_channels])                  # (S_pad, Ck) f32
    val_psp_lo = kv_psp[key_channels:].astype(mxu_dt)                 # (Cv, S_pad)

    # sim^T[s, h] = sum_c key_psp[c, s] * qk[c, h]  -> standard MXU contraction.
    simT = jnp.dot(key_psp_t.astype(mxu_dt), qkT_lo,
                   preferred_element_type=f32)                        # (S_pad, HW)
    simT = simT * (key_channels ** -0.5)

    # Mask the padded pooling rows so they cannot leak into the softmax denom.
    s_idx = lax.broadcasted_iota(jnp.int32, (simT.shape[0], 1), 0)
    simT = jnp.where(s_idx < valid_s, simT, -1e30)

    # Softmax over the S axis (axis 0 here); all math in f32.
    m = jnp.max(simT, axis=0, keepdims=True)                          # (1, HW)
    e = jnp.exp(simT - m)                                             # (S_pad, HW)
    denom = jnp.sum(e, axis=0, keepdims=True)                         # (1, HW)
    inv = pl.reciprocal(denom, approx=approx_recip)                   # 1 recip / token
    smT = e * inv                                                     # (S_pad, HW)

    # Context aggregation + output 1x1 conv (W): both lane-dense matmuls.
    ctxT = jnp.dot(val_psp_lo, smT.astype(mxu_dt),
                   preferred_element_type=f32)                        # (Cv, HW)
    outT = jnp.dot(ww_ref[...], ctxT.astype(mxu_dt),
                   preferred_element_type=f32) + bw_ref[...]          # (Cout, HW)
    o_ref[0] = outT.astype(o_ref.dtype)


# ----------------------------- JAX wrapper --------------------------------

@functools.lru_cache(maxsize=None)
def _pool_matrix(H, W, sizes):
    """Exact PyTorch AdaptiveAvgPool2d (concatenated PSP stages) as (HW, S)."""
    cols = []
    for s in sizes:
        for oi in range(s):
            hs, he = (oi * H) // s, math.ceil((oi + 1) * H / s)
            for oj in range(s):
                ws, we = (oj * W) // s, math.ceil((oj + 1) * W / s)
                m = np.zeros((H, W), dtype=np.float32)
                m[hs:he, ws:we] = 1.0 / ((he - hs) * (we - ws))
                cols.append(m.reshape(-1))
    return np.stack(cols, axis=1)                                     # (HW, S)


def self_attention_block(x_nchw, params, *, key_channels, psp_size=(1, 3, 6, 8),
                         compute_dtype=jnp.bfloat16, approx_recip=True):
    """x_nchw: (N, Cin, H, W) -> (N, Cout, H, W).

    compute_dtype is the MXU-operand dtype (bf16 recommended on v6e/v7x);
    accumulation, biases, and the softmax always run in f32 (v5e has no bf16
    VPU/EUP path, so elementwise math stays f32 everywhere).
    """
    N, Cin, H, W = x_nchw.shape
    HW = H * W
    S = sum(s * s for s in psp_size)
    S_pad = -(-S // 128) * 128                 # ragged S=110 -> full 128-lane tile

    # Fold BatchNorm (eval mode) into the f_key/f_query 1x1 conv.
    gamma, beta = params["bn_gamma"], params["bn_beta"]
    mean, var, eps = params["bn_mean"], params["bn_var"], 1e-5
    inv_std = gamma / jnp.sqrt(var + eps)
    wkT_eff = (params["wk"] * inv_std[None, :]).T                     # (Ck, Cin)
    bk_eff = (params["bk"] - mean) * inv_std + beta                   # (Ck,)

    # Fused, channel-major weights: one projection matmul for key/query + value.
    # (Padding Ck/Cv/Cout up to 128 would further fill the MXU for the real
    #  model; skipped at these toy sizes.)
    wkvT = jnp.concatenate([wkT_eff, params["wv"].T], axis=0)         # (Ck+Cv, Cin)
    bkv = jnp.concatenate([bk_eff, params["bv"]], axis=0)[:, None]    # (Ck+Cv, 1)
    wwT = params["ww"].T                                              # (Cout, Cv)
    bw = params["bw"][:, None]                                        # (Cout, 1)
    Cout, Cv = wwT.shape

    # PSP pooling matrix, zero-padded columns (masked to -inf in-kernel).
    p_np = _pool_matrix(H, W, tuple(psp_size))                        # (HW, S)
    p = jnp.asarray(np.pad(p_np, ((0, 0), (0, S_pad - S))))           # (HW, S_pad)

    # NCHW is already channel-major (N, C, HW): no wrapper transposes needed.
    xT = x_nchw.reshape(N, Cin, HW)

    cdt = compute_dtype
    kernel = functools.partial(_self_attn_kernel, key_channels=key_channels,
                               valid_s=S, approx_recip=approx_recip)

    out = pl.pallas_call(
        kernel,
        out_shape=jax.ShapeDtypeStruct((N, Cout, HW), jnp.float32),
        grid_spec=pltpu.PrefetchScalarGridSpec(
            num_scalar_prefetch=0,
            grid=(N,),
            in_specs=[
                pl.BlockSpec((1, Cin, HW), lambda b: (b, 0, 0)),      # x (per batch)
                pl.BlockSpec(wkvT.shape, lambda b: (0, 0)),           # fused wk|wv
                pl.BlockSpec(bkv.shape, lambda b: (0, 0)),            # fused bias
                pl.BlockSpec(wwT.shape, lambda b: (0, 0)),            # W weight
                pl.BlockSpec(bw.shape, lambda b: (0, 0)),             # W bias
                pl.BlockSpec((HW, S_pad), lambda b: (0, 0)),          # pooling matrix
            ],
            out_specs=pl.BlockSpec((1, Cout, HW), lambda b: (b, 0, 0)),
        ),
        compiler_params=pltpu.CompilerParams(
            dimension_semantics=("parallel",)),   # batch axis feeds both v7x TCs
    )(xT.astype(cdt), wkvT.astype(cdt), bkv.astype(jnp.float32),
      wwT.astype(cdt), bw.astype(jnp.float32), p.astype(cdt))

    return out.reshape(N, Cout, H, W)


# -------------------------- pure-JAX reference -----------------------------

def _reference(x_nchw, params, *, key_channels, psp_size=(1, 3, 6, 8)):
    N, Cin, H, W = x_nchw.shape
    HW = H * W
    gamma, beta = params["bn_gamma"], params["bn_beta"]
    mean, var, eps = params["bn_mean"], params["bn_var"], 1e-5
    inv_std = gamma / jnp.sqrt(var + eps)
    wk_eff = params["wk"] * inv_std[None, :]
    bk_eff = (params["bk"] - mean) * inv_std + beta

    x = jnp.transpose(x_nchw.reshape(N, Cin, HW), (0, 2, 1))           # (N,HW,Cin)
    qk = jnp.maximum(x @ wk_eff + bk_eff, 0.0)                         # (N,HW,Ck)
    v = x @ params["wv"] + params["bv"]                                # (N,HW,Cv)
    P = jnp.asarray(_pool_matrix(H, W, tuple(psp_size)))               # (HW,S)
    key_psp = jnp.einsum("hs,nhc->nsc", P, qk)                         # (N,S,Ck)
    val_psp = jnp.einsum("hs,nhc->nsc", P, v)                          # (N,S,Cv)
    sim = jnp.einsum("nhc,nsc->nhs", qk, key_psp) * key_channels ** -0.5
    sm = jax.nn.softmax(sim, axis=-1)
    ctx = jnp.einsum("nhs,nsc->nhc", sm, val_psp)                      # (N,HW,Cv)
    out = ctx @ params["ww"] + params["bw"]                            # (N,HW,Cout)
    return jnp.transpose(out, (0, 2, 1)).reshape(N, -1, H, W)


# --------------------------------- main ------------------------------------

if __name__ == "__main__":
    N, Cin, H, W = 2, 32, 16, 16
    Ck, Cv = 16, 16
    Cout = Cin  # out_channels defaults to in_channels

    key = jax.random.PRNGKey(0)
    k = jax.random.split(key, 8)
    params = {
        "wk": jax.random.normal(k[0], (Cin, Ck), jnp.float32) * 0.1,
        "bk": jax.random.normal(k[1], (Ck,), jnp.float32) * 0.1,
        "wv": jax.random.normal(k[2], (Cin, Cv), jnp.float32) * 0.1,
        "bv": jax.random.normal(k[3], (Cv,), jnp.float32) * 0.1,
        # NOTE: original module zero-inits W; random used so output is non-trivial.
        "ww": jax.random.normal(k[4], (Cv, Cout), jnp.float32) * 0.1,
        "bw": jax.random.normal(k[5], (Cout,), jnp.float32) * 0.1,
        # BatchNorm at fresh init, eval mode.
        "bn_gamma": jnp.ones((Ck,), jnp.float32),
        "bn_beta": jnp.zeros((Ck,), jnp.float32),
        "bn_mean": jnp.zeros((Ck,), jnp.float32),
        "bn_var": jnp.ones((Ck,), jnp.float32),
    }

    x = jax.random.normal(k[6], (N, Cin, H, W), jnp.float32)
    ref = _reference(x, params, key_channels=Ck)

    fwd = jax.jit(self_attention_block,
                  static_argnames=("key_channels", "psp_size",
                                   "compute_dtype", "approx_recip"))

    # 1) Exact-math path (f32 MXU operands, exact reciprocal): tight check.
    out_exact = jax.block_until_ready(
        fwd(x, params, key_channels=Ck,
            compute_dtype=jnp.float32, approx_recip=False))
    np.testing.assert_allclose(np.asarray(out_exact), np.asarray(ref),
                               rtol=1e-4, atol=1e-4)

    # 2) Fast path (default): bf16 MXU operands + approx EUP reciprocal,
    #    f32 accumulation/softmax. Loose tolerance covers bf16 rounding.
    out_fast = jax.block_until_ready(fwd(x, params, key_channels=Ck))
    np.testing.assert_allclose(np.asarray(out_fast), np.asarray(ref),
                               rtol=1e-1, atol=1e-1)

    assert out_exact.shape == (N, Cout, H, W)
    assert out_fast.shape == (N, Cout, H, W)
    print("KERNEL_OK")
</pallas_src>

<mosaic_0001>
module attributes {stable_mosaic.version = 11 : i64} {
  func.func @_self_attn_kernel(%arg0: i32, %arg1: memref<1x32x256xf32, #tpu.memory_space<vmem>>, %arg2: memref<32x32xf32, #tpu.memory_space<vmem>>, %arg3: memref<32x1xf32, #tpu.memory_space<vmem>>, %arg4: memref<32x16xf32, #tpu.memory_space<vmem>>, %arg5: memref<32x1xf32, #tpu.memory_space<vmem>>, %arg6: memref<256x128xf32, #tpu.memory_space<vmem>>, %arg7: memref<1x32x256xf32, #tpu.memory_space<vmem>>) attributes {dimension_semantics = [#tpu.dimension_semantics<parallel>], iteration_bounds = array<i64: 2>, scalar_prefetch = 0 : i64, scratch_operands = 0 : i64, tpu.core_type = #tpu.core_type<tc>, window_params = [{transform_indices = @transform_0, window_bounds = array<i64: 1, 32, 256>}, {pipeline_mode = #tpu.pipeline_mode<synchronous>, transform_indices = @transform_1, window_bounds = array<i64: 32, 32>}, {pipeline_mode = #tpu.pipeline_mode<synchronous>, transform_indices = @transform_2, window_bounds = array<i64: 32, 1>}, {pipeline_mode = #tpu.pipeline_mode<synchronous>, transform_indices = @transform_3, window_bounds = array<i64: 32, 16>}, {pipeline_mode = #tpu.pipeline_mode<synchronous>, transform_indices = @transform_4, window_bounds = array<i64: 32, 1>}, {pipeline_mode = #tpu.pipeline_mode<synchronous>, transform_indices = @transform_5, window_bounds = array<i64: 256, 128>}, {transform_indices = @transform_6, window_bounds = array<i64: 1, 32, 256>}]} {
    %c0 = arith.constant 0 : index
    %c0_0 = arith.constant 0 : index
    %c0_1 = arith.constant 0 : index
    %0 = vector.load %arg1[%c0, %c0_0, %c0_1] : memref<1x32x256xf32, #tpu.memory_space<vmem>>, vector<1x32x256xf32>
    %1 = vector.shape_cast %0 : vector<1x32x256xf32> to vector<32x256xf32>
    %c0_2 = arith.constant 0 : index
    %c0_3 = arith.constant 0 : index
    %2 = vector.load %arg2[%c0_2, %c0_3] : memref<32x32xf32, #tpu.memory_space<vmem>>, vector<32x32xf32>
    %cst = arith.constant dense<0.000000e+00> : vector<32x256xf32>
    %3 = tpu.matmul %2, %1, %cst {dimension_numbers = #tpu.dot_dimension_numbers<[1], [0], [0], [1], [0, 0, 1, 1], [], []>} : vector<32x32xf32>, vector<32x256xf32>, vector<32x256xf32> -> vector<32x256xf32>
    %c0_4 = arith.constant 0 : index
    %c0_5 = arith.constant 0 : index
    %4 = vector.load %arg3[%c0_4, %c0_5] : memref<32x1xf32, #tpu.memory_space<vmem>>, vector<32x1xf32>
    %5 = vector.broadcast %4 : vector<32x1xf32> to vector<32x256xf32>
    %6 = arith.addf %3, %5 : vector<32x256xf32>
    %7 = tpu.iota {dimensions = array<i32: 0>} : vector<32x1xi32>
    %c16_i32 = arith.constant 16 : i32
    %8 = vector.broadcast %c16_i32 : i32 to vector<32x1xi32>
    %9 = arith.cmpi slt, %7, %8 : vector<32x1xi32>
    %cst_6 = arith.constant 0.000000e+00 : f32
    %10 = vector.broadcast %cst_6 : f32 to vector<32x256xf32>
    %11 = arith.maximumf %6, %10 : vector<32x256xf32>
    %12 = vector.shape_cast %9 : vector<32x1xi1> to vector<32x1xi1>
    %13 = vector.broadcast %12 : vector<32x1xi1> to vector<32x256xi1>
    %14 = arith.select %13, %11, %6 : vector<32x256xi1>, vector<32x256xf32>
    %c0_7 = arith.constant 0 : index
    %c0_8 = arith.constant 0 : index
    %15 = vector.load %arg6[%c0_7, %c0_8] : memref<256x128xf32, #tpu.memory_space<vmem>>, vector<256x128xf32>
    %cst_9 = arith.constant dense<0.000000e+00> : vector<32x128xf32>
    %16 = tpu.matmul %14, %15, %cst_9 {dimension_numbers = #tpu.dot_dimension_numbers<[1], [0], [0], [1], [0, 0, 1, 1], [], []>} : vector<32x256xf32>, vector<256x128xf32>, vector<32x128xf32> -> vector<32x128xf32>
    %17 = vector.extract_strided_slice %14 {offsets = [0, 0], sizes = [16, 256], strides = [1, 1]} : vector<32x256xf32> to vector<16x256xf32>
    %18 = vector.extract_strided_slice %16 {offsets = [0, 0], sizes = [16, 128], strides = [1, 1]} : vector<32x128xf32> to vector<16x128xf32>
    %19 = tpu.transpose %18, [1, 0] : vector<16x128xf32> -> vector<128x16xf32>
    %20 = vector.extract_strided_slice %16 {offsets = [16, 0], sizes = [16, 128], strides = [1, 1]} : vector<32x128xf32> to vector<16x128xf32>
    %cst_10 = arith.constant dense<0.000000e+00> : vector<128x256xf32>
    %21 = tpu.matmul %19, %17, %cst_10 {dimension_numbers = #tpu.dot_dimension_numbers<[1], [0], [0], [1], [0, 0, 1, 1], [], []>} : vector<128x16xf32>, vector<16x256xf32>, vector<128x256xf32> -> vector<128x256xf32>
    %cst_11 = arith.constant 2.500000e-01 : f32
    %22 = vector.broadcast %cst_11 : f32 to vector<128x256xf32>
    %23 = arith.mulf %21, %22 : vector<128x256xf32>
    %24 = tpu.iota {dimensions = array<i32: 0>} : vector<128x1xi32>
    %c110_i32 = arith.constant 110 : i32
    %25 = vector.broadcast %c110_i32 : i32 to vector<128x1xi32>
    %26 = arith.cmpi slt, %24, %25 : vector<128x1xi32>
    %cst_12 = arith.constant -1.000000e+30 : f32
    %27 = vector.shape_cast %26 : vector<128x1xi1> to vector<128x1xi1>
    %28 = vector.broadcast %27 : vector<128x1xi1> to vector<128x256xi1>
    %29 = vector.broadcast %cst_12 : f32 to vector<128x256xf32>
    %30 = arith.select %28, %23, %29 : vector<128x256xi1>, vector<128x256xf32>
    %cst_13 = arith.constant dense<0xFF800000> : vector<256xf32>
    %31 = vector.multi_reduction <maximumf>, %30, %cst_13 [0] : vector<128x256xf32> to vector<256xf32>
    %32 = vector.shape_cast %31 : vector<256xf32> to vector<1x256xf32>
    %33 = vector.broadcast %32 : vector<1x256xf32> to vector<128x256xf32>
    %34 = arith.subf %30, %33 : vector<128x256xf32>
    %35 = math.exp %34 : vector<128x256xf32>
    %cst_14 = arith.constant dense<0.000000e+00> : vector<256xf32>
    %36 = vector.multi_reduction <add>, %35, %cst_14 [0] : vector<128x256xf32> to vector<256xf32>
    %37 = vector.shape_cast %36 : vector<256xf32> to vector<1x256xf32>
    %38 = tpu.reciprocal %37 : vector<1x256xf32> -> vector<1x256xf32>
    %39 = vector.broadcast %38 : vector<1x256xf32> to vector<128x256xf32>
    %40 = arith.mulf %35, %39 : vector<128x256xf32>
    %cst_15 = arith.constant dense<0.000000e+00> : vector<16x256xf32>
    %41 = tpu.matmul %20, %40, %cst_15 {dimension_numbers = #tpu.dot_dimension_numbers<[1], [0], [0], [1], [0, 0, 1, 1], [], []>} : vector<16x128xf32>, vector<128x256xf32>, vector<16x256xf32> -> vector<16x256xf32>
    %c0_16 = arith.constant 0 : index
    %c0_17 = arith.constant 0 : index
    %42 = vector.load %arg4[%c0_16, %c0_17] : memref<32x16xf32, #tpu.memory_space<vmem>>, vector<32x16xf32>
    %cst_18 = arith.constant dense<0.000000e+00> : vector<32x256xf32>
    %43 = tpu.matmul %42, %41, %cst_18 {dimension_numbers = #tpu.dot_dimension_numbers<[1], [0], [0], [1], [0, 0, 1, 1], [], []>} : vector<32x16xf32>, vector<16x256xf32>, vector<32x256xf32> -> vector<32x256xf32>
    %c0_19 = arith.constant 0 : index
    %c0_20 = arith.constant 0 : index
    %44 = vector.load %arg5[%c0_19, %c0_20] : memref<32x1xf32, #tpu.memory_space<vmem>>, vector<32x1xf32>
    %45 = vector.broadcast %44 : vector<32x1xf32> to vector<32x256xf32>
    %46 = arith.addf %43, %45 : vector<32x256xf32>
    %c0_21 = arith.constant 0 : index
    %c0_22 = arith.constant 0 : index
    %c0_23 = arith.constant 0 : index
    %47 = vector.load %arg7[%c0_21, %c0_22, %c0_23] : memref<1x32x256xf32, #tpu.memory_space<vmem>>, vector<1x32x256xf32>
    %48 = vector.shape_cast %47 : vector<1x32x256xf32> to vector<32x256xf32>
    %49 = vector.shape_cast %46 : vector<32x256xf32> to vector<1x32x256xf32>
    tpu.vector_store %arg7[%c0_21, %c0_22, %c0_23], %49 {strides = array<i32>} : memref<1x32x256xf32, #tpu.memory_space<vmem>>, vector<1x32x256xf32>,
    return
  }
  func.func @transform_0(%arg0: i32) -> (i32, i32, i32) {
    %c0_i32 = arith.constant 0 : i32
    %c0_i32_0 = arith.constant 0 : i32
    %c0_i32_1 = arith.constant 0 : i32
    return %arg0, %c0_i32, %c0_i32_0 : i32, i32, i32
  }
  func.func @transform_1(%arg0: i32) -> (i32, i32) {
    %c0_i32 = arith.constant 0 : i32
    %c0_i32_0 = arith.constant 0 : i32
    %c0_i32_1 = arith.constant 0 : i32
    return %c0_i32, %c0_i32_0 : i32, i32
  }
  func.func @transform_2(%arg0: i32) -> (i32, i32) {
    %c0_i32 = arith.constant 0 : i32
    %c0_i32_0 = arith.constant 0 : i32
    %c0_i32_1 = arith.constant 0 : i32
    return %c0_i32, %c0_i32_0 : i32, i32
  }
  func.func @transform_3(%arg0: i32) -> (i32, i32) {
    %c0_i32 = arith.constant 0 : i32
    %c0_i32_0 = arith.constant 0 : i32
    %c0_i32_1 = arith.constant 0 : i32
    return %c0_i32, %c0_i32_0 : i32, i32
  }
  func.func @transform_4(%arg0: i32) -> (i32, i32) {
    %c0_i32 = arith.constant 0 : i32
    %c0_i32_0 = arith.constant 0 : i32
    %c0_i32_1 = arith.constant 0 : i32
    return %c0_i32, %c0_i32_0 : i32, i32
  }
  func.func @transform_5(%arg0: i32) -> (i32, i32) {
    %c0_i32 = arith.constant 0 : i32
    %c0_i32_0 = arith.constant 0 : i32
    %c0_i32_1 = arith.constant 0 : i32
    return %c0_i32, %c0_i32_0 : i32, i32
  }
  func.func @transform_6(%arg0: i32) -> (i32, i32, i32) {
    %c0_i32 = arith.constant 0 : i32
    %c0_i32_0 = arith.constant 0 : i32
    %c0_i32_1 = arith.constant 0 : i32
    return %arg0, %c0_i32, %c0_i32_0 : i32, i32, i32
  }
}

</mosaic_0001>

<llo_original>
// kernel: self_attention_block.1
$region0: #{self_attention_block.1}
  #allocation0 [shape = 'u32[]', space=smem, size = 0x4, offset = 0x4, fixed_abs, tag = 'smem constant byte address 0x4 - core index']
  #allocation1 [shape = 'u32[72,128]{1,0:T(1,128)}', space=vmem, size = 0x9000, scoped, tag = 'internal scratch']
  %s0 = inlined_call_operand.vmem [shape: f32[2,32,256], index: 0, kind: input, shape index: {}]
  %s1 = inlined_call_operand.vmem [shape: f32[32,32], index: 1, kind: input, shape index: {}]
  %s2 = inlined_call_operand.vmem [shape: f32[32,1], index: 2, kind: input, shape index: {}]
  %s3 = inlined_call_operand.vmem [shape: f32[32,16], index: 3, kind: input, shape index: {}]
  %s4 = inlined_call_operand.vmem [shape: f32[32,1], index: 4, kind: input, shape index: {}]
  %s5 = inlined_call_operand.vmem [shape: f32[256,128], index: 5, kind: input, shape index: {}]
  %s6 = inlined_call_operand.vmem [shape: f32[2,32,256], index: 6, kind: output, shape index: {}]
  %s7 = sld [smem:[#allocation0]]
  $region57: #{self_attention_block.1} parent=0
    _
  %s9 = ssub.s32 1, %s7
  %s10 = scalar_select 0, %s9, %s7
  loop: start=0, step=1, limit=4
  $region2: #{self_attention_block.1} parent=0 // loop_pre_header
    _
  $region3: #{self_attention_block.1} parent=0 // loop_header
    %s12 = sphi 0, %s16
    %p13 = scmp.ge.s32.totalorder %s12, 4
    %s22 = sphi 0, %s24
    %s25 = sphi 0, %s22
    %s26 = sphi 0, %s25
    %s42 = sphi 0, %s26
    %s46 = sphi 0, %s46
    %s48 = sphi 0, %s46
    %s49 = sphi 0, %s48
    %s63 = sphi 0, %s49
    %s67 = sphi 0, %s67
    %s69 = sphi 0, %s67
    %s70 = sphi 0, %s69
    %s84 = sphi 0, %s70
    %s88 = sphi 0, %s88
    %s90 = sphi 0, %s88
    %s91 = sphi 0, %s90
    %s105 = sphi 0, %s91
    %s109 = sphi 0, %s109
    %s111 = sphi 0, %s109
    %s112 = sphi 0, %s111
    %s126 = sphi 0, %s112
    %s130 = sphi 0, %s130
    %s132 = sphi 0, %s130
    %s133 = sphi 0, %s132
    %s147 = sphi 0, %s133
    %s153 = sphi 0, %s155
    %s156 = sphi 0, %s153
    %s157 = sphi 0, %s156
    %s173 = sphi 0, %s157
  $region4: #{self_attention_block.1} parent=0 // loop_header_branch
    %15 = sbr.rel (%p13) target = $region8
  $region5: #{self_attention_block.1} parent=0 // loop_body
    %s17 = ssub.s32 %s12, 1
    %s18 = ssub.s32 %s12, 2
    %s19 = sadd.s32 %s12, 1
    %s20 = ssub.s32 %s12, %s19
    %p21 = scmp.eq.s32.totalorder %s20, 0
    %s23 = sadd.s32 %s22, 1
    %s24 = scalar_select %p21, %s22, %s23
    %p27 = pneg %p21
    %p28 = scmp.eq.s32.totalorder %s12, 1
    %p29 = por %p27, %p28
    %p30 = scmp.ne.s32.totalorder %s22, %s25
    %p31 = scmp.eq.s32.totalorder %s12, 0
    %p32 = por %p30, %p31
    %p33 = scmp.ne.s32.totalorder %s22, %s25
    %p34 = scmp.eq.s32.totalorder %s17, 1
    %p35 = por %p33, %p34
    %p36 = scmp.ne.s32.totalorder %s25, %s26
    %p37 = scmp.eq.s32.totalorder %s17, 0
    %p38 = por %p36, %p37
    %p39 = scmp.ne.s32.totalorder %s25, %s26
    %p40 = scmp.eq.s32.totalorder %s18, 1
    %p41 = por %p39, %p40
    %p43 = scmp.ne.s32.totalorder %s26, %s42
    %p44 = scmp.eq.s32.totalorder %s18, 0
    %p45 = por %p43, %p44
    %s47 = sadd.s32 %s46, 1
    %p50 = scmp.eq.s32.totalorder %s12, 1
    %p51 = scmp.ne.s32.totalorder %s46, %s48
    %p52 = scmp.eq.s32.totalorder %s12, 0
    %p53 = por %p51, %p52
    %p54 = scmp.ne.s32.totalorder %s46, %s48
    %p55 = scmp.eq.s32.totalorder %s17, 1
    %p56 = por %p54, %p55
    %p57 = scmp.ne.s32.totalorder %s48, %s49
    %p58 = scmp.eq.s32.totalorder %s17, 0
    %p59 = por %p57, %p58
    %p60 = scmp.ne.s32.totalorder %s48, %s49
    %p61 = scmp.eq.s32.totalorder %s18, 1
    %p62 = por %p60, %p61
    %p64 = scmp.ne.s32.totalorder %s49, %s63
    %p65 = scmp.eq.s32.totalorder %s18, 0
    %p66 = por %p64, %p65
    %s68 = sadd.s32 %s67, 1
    %p71 = scmp.eq.s32.totalorder %s12, 1
    %p72 = scmp.ne.s32.totalorder %s67, %s69
    %p73 = scmp.eq.s32.totalorder %s12, 0
    %p74 = por %p72, %p73
    %p75 = scmp.ne.s32.totalorder %s67, %s69
    %p76 = scmp.eq.s32.totalorder %s17, 1
    %p77 = por %p75, %p76
    %p78 = scmp.ne.s32.totalorder %s69, %s70
    %p79 = scmp.eq.s32.totalorder %s17, 0
    %p80 = por %p78, %p79
    %p81 = scmp.ne.s32.totalorder %s69, %s70
    %p82 = scmp.eq.s32.totalorder %s18, 1
    %p83 = por %p81, %p82
    %p85 = scmp.ne.s32.totalorder %s70, %s84
    %p86 = scmp.eq.s32.totalorder %s18, 0
    %p87 = por %p85, %p86
    %s89 = sadd.s32 %s88, 1
    %p92 = scmp.eq.s32.totalorder %s12, 1
    %p93 = scmp.ne.s32.totalorder %s88, %s90
    %p94 = scmp.eq.s32.totalorder %s12, 0
    %p95 = por %p93, %p94
    %p96 = scmp.ne.s32.totalorder %s88, %s90
    %p97 = scmp.eq.s32.totalorder %s17, 1
    %p98 = por %p96, %p97
    %p99 = scmp.ne.s32.totalorder %s90, %s91
    %p100 = scmp.eq.s32.totalorder %s17, 0
    %p101 = por %p99, %p100
    %p102 = scmp.ne.s32.totalorder %s90, %s91
    %p103 = scmp.eq.s32.totalorder %s18, 1
    %p104 = por %p102, %p103
    %p106 = scmp.ne.s32.totalorder %s91, %s105
    %p107 = scmp.eq.s32.totalorder %s18, 0
    %p108 = por %p106, %p107
    %s110 = sadd.s32 %s109, 1
    %p113 = scmp.eq.s32.totalorder %s12, 1
    %p114 = scmp.ne.s32.totalorder %s109, %s111
    %p115 = scmp.eq.s32.totalorder %s12, 0
    %p116 = por %p114, %p115
    %p117 = scmp.ne.s32.totalorder %s109, %s111
    %p118 = scmp.eq.s32.totalorder %s17, 1
    %p119 = por %p117, %p118
    %p120 = scmp.ne.s32.totalorder %s111, %s112
    %p121 = scmp.eq.s32.totalorder %s17, 0
    %p122 = por %p120, %p121
    %p123 = scmp.ne.s32.totalorder %s111, %s112
    %p124 = scmp.eq.s32.totalorder %s18, 1
    %p125 = por %p123, %p124
    %p127 = scmp.ne.s32.totalorder %s112, %s126
    %p128 = scmp.eq.s32.totalorder %s18, 0
    %p129 = por %p127, %p128
    %s131 = sadd.s32 %s130, 1
    %p134 = scmp.eq.s32.totalorder %s12, 1
    %p135 = scmp.ne.s32.totalorder %s130, %s132
    %p136 = scmp.eq.s32.totalorder %s12, 0
    %p137 = por %p135, %p136
    %p138 = scmp.ne.s32.totalorder %s130, %s132
    %p139 = scmp.eq.s32.totalorder %s17, 1
    %p140 = por %p138, %p139
    %p141 = scmp.ne.s32.totalorder %s132, %s133
    %p142 = scmp.eq.s32.totalorder %s17, 0
    %p143 = por %p141, %p142
    %p144 = scmp.ne.s32.totalorder %s132, %s133
    %p145 = scmp.eq.s32.totalorder %s18, 1
    %p146 = por %p144, %p145
    %p148 = scmp.ne.s32.totalorder %s133, %s147
    %p149 = scmp.eq.s32.totalorder %s18, 0
    %p150 = por %p148, %p149
    %s151 = ssub.s32 %s12, %s19
    %p152 = scmp.eq.s32.totalorder %s151, 0
    %s154 = sadd.s32 %s153, 1
    %s155 = scalar_select %p152, %s153, %s154
    %p158 = pneg %p152
    %p159 = scmp.eq.s32.totalorder %s12, 1
    %p160 = por %p158, %p159
    %p161 = scmp.ne.s32.totalorder %s153, %s156
    %p162 = scmp.eq.s32.totalorder %s12, 0
    %p163 = por %p161, %p162
    %p164 = scmp.ne.s32.totalorder %s153, %s156
    %p165 = scmp.eq.s32.totalorder %s17, 1
    %p166 = por %p164, %p165
    %p167 = scmp.ne.s32.totalorder %s156, %s157
    %p168 = scmp.eq.s32.totalorder %s17, 0
    %p169 = por %p167, %p168
    %p170 = scmp.ne.s32.totalorder %s156, %s157
    %p171 = scmp.eq.s32.totalorder %s18, 1
    %p172 = por %p170, %p171
    %p174 = scmp.ne.s32.totalorder %s157, %s173
    %p175 = scmp.eq.s32.totalorder %s18, 0
    %p176 = por %p174, %p175
    %p177 = scmp.le.s32.totalorder 1, %s12
    %p178 = scmp.lt.s32.totalorder %s12, 3
    %p179 = pnand %p177, %p178
    %p180 = pneg %p179
    // Predicated region
    $region9: #{self_attention_block.1} parent=5 // pred_check
      _
    $region10: #{self_attention_block.1} parent=5 // pred_check_branch
      %182 = sbr.rel (%p179) target = $region12
    $region11: #{self_attention_block.1} parent=5 // pred_region
      %s183 = ssub.s32 %s12, 1
      // Predicated region
      $region13: #{self_attention_block.1} parent=11 // pred_check
        %p184 = pneg %p59
      $region14: #{self_attention_block.1} parent=11 // pred_check_branch
        %186 = sbr.rel (%p184) target = $region16
      $region15: #{self_attention_block.1} parent=11 // pred_region
        _
      $region16: #{self_attention_block.1} parent=11 // pred_fallthru
        _
      // Predicated region
      $region17: #{self_attention_block.1} parent=11 // pred_check
        %p187 = pneg %p80
      $region18: #{self_attention_block.1} parent=11 // pred_check_branch
        %189 = sbr.rel (%p187) target = $region20
      $region19: #{self_attention_block.1} parent=11 // pred_region
        _
      $region20: #{self_attention_block.1} parent=11 // pred_fallthru
        _
      // Predicated region
      $region21: #{self_attention_block.1} parent=11 // pred_check
        %p190 = pneg %p101
      $region22: #{self_attention_block.1} parent=11 // pred_check_branch
        %192 = sbr.rel (%p190) target = $region24
      $region23: #{self_attention_block.1} parent=11 // pred_region
        _
      $region24: #{self_attention_block.1} parent=11 // pred_fallthru
        _
      // Predicated region
      $region25: #{self_attention_block.1} parent=11 // pred_check
        %p193 = pneg %p122
      $region26: #{self_attention_block.1} parent=11 // pred_check_branch
        %195 = sbr.rel (%p193) target = $region28
      $region27: #{self_attention_block.1} parent=11 // pred_region
        _
      $region28: #{self_attention_block.1} parent=11 // pred_fallthru
        _
      // Predicated region
      $region29: #{self_attention_block.1} parent=11 // pred_check
        %p196 = pneg %p143
      $region30: #{self_attention_block.1} parent=11 // pred_check_branch
        %198 = sbr.rel (%p196) target = $region32
      $region31: #{self_attention_block.1} parent=11 // pred_region
        _
      $region32: #{self_attention_block.1} parent=11 // pred_fallthru
        _
    $region12: #{self_attention_block.1} parent=5 // pred_fallthru
      _
    %p199 = scmp.lt.s32.totalorder %s12, 2
    // Predicated region
    $region33: #{self_attention_block.1} parent=5 // pred_check
      %p200 = pneg %p199
    $region34: #{self_attention_block.1} parent=5 // pred_check_branch
      %202 = sbr.rel (%p200) target = $region36
    $region35: #{self_attention_block.1} parent=5 // pred_region
      // Predicated region
      $region37: #{self_attention_block.1} parent=35 // pred_check
        %p203 = pneg %p32
      $region38: #{self_attention_block.1} parent=35 // pred_check_branch
        %205 = sbr.rel (%p203) target = $region40
      $region39: #{self_attention_block.1} parent=35 // pred_region
        %p206 = scmp.lt.s32.totalorder %s12, 1
        %s207 = scalar_select %p206, %s12, 1
        %s208 = smul.addr %s207, 8
        %s209 = smul.addr %s208, 8
        %s210 = scalar_lea.vmem %s0, %s209
      $region40: #{self_attention_block.1} parent=35 // pred_fallthru
        _
    $region36: #{self_attention_block.1} parent=5 // pred_fallthru
      _
    %p211 = scmp.le.s32.totalorder 1, %s12
    %p212 = scmp.lt.s32.totalorder %s12, 3
    %p213 = pnand %p211, %p212
    %p214 = pneg %p213
    // Predicated region
    $region41: #{self_attention_block.1} parent=5 // pred_check
      _
    $region42: #{self_attention_block.1} parent=5 // pred_check_branch
      %216 = sbr.rel (%p213) target = $region44
    $region43: #{self_attention_block.1} parent=5 // pred_region
      %s217 = ssub.s32 %s12, 1
      %p218 = scmp.lt.s32.totalorder %s17, 1
      %s219 = scalar_select %p218, %s17, 1
      %s220 = smul.addr %s219, 8
      %s221 = smul.addr %s220, 8
      %s222 = scalar_lea.vmem %s0, %s221
      %p223 = pneg %p38
      %p224 = pneg %p35
      %p225 = pneg %p59
      %p226 = pneg %p56
      %p227 = pneg %p80
      %p228 = pneg %p77
      %p229 = pneg %p101
      %p230 = pneg %p98
      %p231 = pneg %p122
      %p232 = pneg %p119
      %p233 = pneg %p143
      %p234 = pneg %p140
      %p235 = pneg %p169
      %p236 = pneg %p166
      %p237 = scmp.lt.s32.totalorder %s17, 1
      %s238 = scalar_select %p237, %s17, 1
      %s239 = smul.addr %s238, 8
      %s240 = smul.addr %s239, 8
      %s241 = scalar_lea.vmem %s6, %s240
      %p242 = scmp.lt.s32.totalorder %s17, 1
      %s243 = scalar_select %p242, %s17, 1
      %s244 = smul.addr %s243, 8
      %s245 = smul.addr %s244, 8
      %s246 = scalar_lea.vmem %s0, %s245
      %p247 = scmp.lt.s32.totalorder %s17, 1
      %s248 = scalar_select %p247, %s17, 1
      %s249 = smul.addr %s248, 8
      %s250 = smul.addr %s249, 8
      %s251 = scalar_lea.vmem %s6, %s250
      %v252 = vld [vmem:[%s246] sm:$0xff]
      %v253 = vld [vmem:[%s246 + $0x8] sm:$0xff]
      %v254 = vld [vmem:[%s246 + $0x10] sm:$0xff]
      %v255 = vld [vmem:[%s246 + $0x18] sm:$0xff]
      %v256 = vld [vmem:[%s246 + $0x20] sm:$0xff]
      %v257 = vld [vmem:[%s246 + $0x28] sm:$0xff]
      %v258 = vld [vmem:[%s246 + $0x30] sm:$0xff]
      %v259 = vld [vmem:[%s246 + $0x38] sm:$0xff]
      %v260 = vld [vmem:[%s1] sm:$0xff]
      %v261 = vld [vmem:[%s1 + $0x8] sm:$0xff]
      %v262 = vld [vmem:[%s1 + $0x10] sm:$0xff]
      %v263 = vld [vmem:[%s1 + $0x18] sm:$0xff]
      %v264 = vld [vmem:[%s2] sm:$0xff]
      %v265 = vld [vmem:[%s2 + $0x8] sm:$0xff]
      %v266 = vld [vmem:[%s2 + $0x10] sm:$0xff]
      %v267 = vld [vmem:[%s2 + $0x18] sm:$0xff]
      %269 = vset.pattern.permute.xlu0 0
      %270 = vperm.xlu0 %269, %v264
      %v271 = vpop.permute.xlu0 %270
      %274 = vset.pattern.permute.xlu0 0
      %275 = vperm.xlu0 %274, %v265
      %v276 = vpop.permute.xlu0 %275
      %279 = vset.pattern.permute.xlu0 0
      %280 = vperm.xlu0 %279, %v266
      %v281 = vpop.permute.xlu0 %280
      %284 = vset.pattern.permute.xlu0 0
      %285 = vperm.xlu0 %284, %v267
      %v286 = vpop.permute.xlu0 %285
      %vm288 = vcmask 261120
      %v290 = vsel %vm288, %v260, 0
      %v293 = vsel %vm288, %v261, 0
      %v296 = vsel %vm288, %v262, 0
      %v299 = vsel %vm288, %v263, 0
      %301 = vmatpush.msra.mxu0 0.0
      %302 = vmatpush.msra.mxu0 0.0
      %303 = vmatpush.msra.mxu0 0.0
      %304 = vmatpush.msra.mxu0 0.0
      %305 = vmatpush.msra.mxu0 0.0
      %306 = vmatpush.msra.mxu0 0.0
      %307 = vmatpush.msra.mxu0 0.0
      %308 = vmatpush.msra.mxu0 0.0
      %309 = vmatpush.msra.mxu0 0.0
      %310 = vmatpush.msra.mxu0 0.0
      %311 = vmatpush.msra.mxu0 0.0
      %312 = vmatpush.msra.mxu0 0.0
      %313 = vmatpush.msra.mxu0 %v258
      %314 = vmatpush.msra.mxu0 %v256
      %315 = vmatpush.msra.mxu0 %v254
      %316 = vmatpush.msra.mxu0 %v252
      %317 = vmatmul.f32.gmra.mxu0 %v290
      %v318 = vpop.f32.mrf.mxu0
      %v319 = vadd.f32 %v271, %v318
      %320 = vmatmul.f32.gmra.mxu0 %v293
      %v321 = vpop.f32.mrf.mxu0
      %v322 = vadd.f32 %v276, %v321
      %323 = vmatmul.f32.gmra.mxu0 %v296
      %v324 = vpop.f32.mrf.mxu0
      %v325 = vadd.f32 %v281, %v324
      %326 = vmatmul.f32.gmra.mxu0 %v299
      %v327 = vpop.f32.mrf.mxu0
      %v328 = vadd.f32 %v286, %v327
      %329 = vdwg.mxu0
      %330 = vmatpush.msra.mxu0 0.0
      %331 = vmatpush.msra.mxu0 0.0
      %332 = vmatpush.msra.mxu0 0.0
      %333 = vmatpush.msra.mxu0 0.0
      %334 = vmatpush.msra.mxu0 0.0
      %335 = vmatpush.msra.mxu0 0.0
      %336 = vmatpush.msra.mxu0 0.0
      %337 = vmatpush.msra.mxu0 0.0
      %338 = vmatpush.msra.mxu0 0.0
      %339 = vmatpush.msra.mxu0 0.0
      %340 = vmatpush.msra.mxu0 0.0
      %341 = vmatpush.msra.mxu0 0.0
      %342 = vmatpush.msra.mxu0 %v259
      %343 = vmatpush.msra.mxu0 %v257
      %344 = vmatpush.msra.mxu0 %v255
      %345 = vmatpush.msra.mxu0 %v253
      %346 = vmatmul.f32.gmra.mxu0 %v290
      %v347 = vpop.f32.mrf.mxu0
      %v348 = vadd.f32 %v271, %v347
      %349 = vmatmul.f32.gmra.mxu0 %v293
      %v350 = vpop.f32.mrf.mxu0
      %v351 = vadd.f32 %v276, %v350
      %352 = vmatmul.f32.gmra.mxu0 %v296
      %v353 = vpop.f32.mrf.mxu0
      %v354 = vadd.f32 %v281, %v353
      %355 = vmatmul.f32.gmra.mxu0 %v299
      %v356 = vpop.f32.mrf.mxu0
      %v357 = vadd.f32 %v286, %v356
      %358 = vdwg.mxu0
      %v359 = vlaneseq
      %v360 = vshrl.u32 %v359, 7
      %v361 = vadd.s32 %v360, 8
      %v362 = vadd.s32 %v360, 16
      %v363 = vadd.s32 %v360, 24
      %vm364 = vcmp.lt.s32.totalorder %v360, 16
      %vm365 = vcmp.lt.s32.totalorder %v361, 16
      %vm366 = vcmp.lt.s32.totalorder %v362, 16
      %vm367 = vcmp.lt.s32.totalorder %v363, 16
      %v368 = vmax.f32 %v319, 0.0
      %v369 = vmax.f32 %v348, 0.0
      %v370 = vmax.f32 %v322, 0.0
      %v371 = vmax.f32 %v351, 0.0
      %v372 = vmax.f32 %v325, 0.0
      %v373 = vmax.f32 %v354, 0.0
      %v374 = vmax.f32 %v328, 0.0
      %v375 = vmax.f32 %v357, 0.0
      %v376 = vsel %vm364, 1, 0
      %v377 = vsel %vm365, 1, 0
      %v378 = vsel %vm366, 1, 0
      %v379 = vsel %vm367, 1, 0
      %vm380 = vcmp.eq.s32.totalorder %v376, 1
      %vm381 = vcmp.eq.s32.totalorder %v377, 1
      %vm382 = vcmp.eq.s32.totalorder %v378, 1
      %vm383 = vcmp.eq.s32.totalorder %v379, 1
      %v384 = vsel %vm380, %v368, %v319
      %v385 = vsel %vm380, %v369, %v348
      %v386 = vsel %vm381, %v370, %v322
      %v387 = vsel %vm381, %v371, %v351
      %v388 = vsel %vm382, %v372, %v325
      %v389 = vsel %vm382, %v373, %v354
      %v390 = vsel %vm383, %v374, %v328
      %v391 = vsel %vm383, %v375, %v357
      %v392 = vld [vmem:[%s5] sm:$0xff]
      %v393 = vld [vmem:[%s5 + $0x8] sm:$0xff]
      %v394 = vld [vmem:[%s5 + $0x10] sm:$0xff]
      %v395 = vld [vmem:[%s5 + $0x18] sm:$0xff]
      %v396 = vld [vmem:[%s5 + $0x20] sm:$0xff]
      %v397 = vld [vmem:[%s5 + $0x28] sm:$0xff]
      %v398 = vld [vmem:[%s5 + $0x30] sm:$0xff]
      %v399 = vld [vmem:[%s5 + $0x38] sm:$0xff]
      %v400 = vld [vmem:[%s5 + $0x40] sm:$0xff]
      %v401 = vld [vmem:[%s5 + $0x48] sm:$0xff]
      %v402 = vld [vmem:[%s5 + $0x50] sm:$0xff]
      %v403 = vld [vmem:[%s5 + $0x58] sm:$0xff]
      %v404 = vld [vmem:[%s5 + $0x60] sm:$0xff]
      %v405 = vld [vmem:[%s5 + $0x68] sm:$0xff]
      %v406 = vld [vmem:[%s5 + $0x70] sm:$0xff]
      %v407 = vld [vmem:[%s5 + $0x78] sm:$0xff]
      %v408 = vld [vmem:[%s5 + $0x80] sm:$0xff]
      %v409 = vld [vmem:[%s5 + $0x88] sm:$0xff]
      %v410 = vld [vmem:[%s5 + $0x90] sm:$0xff]
      %v411 = vld [vmem:[%s5 + $0x98] sm:$0xff]
      %v412 = vld [vmem:[%s5 + $0xa0] sm:$0xff]
      %v413 = vld [vmem:[%s5 + $0xa8] sm:$0xff]
      %v414 = vld [vmem:[%s5 + $0xb0] sm:$0xff]
      %v415 = vld [vmem:[%s5 + $0xb8] sm:$0xff]
      %v416 = vld [vmem:[%s5 + $0xc0] sm:$0xff]
      %v417 = vld [vmem:[%s5 + $0xc8] sm:$0xff]
      %v418 = vld [vmem:[%s5 + $0xd0] sm:$0xff]
      %v419 = vld [vmem:[%s5 + $0xd8] sm:$0xff]
      %v420 = vld [vmem:[%s5 + $0xe0] sm:$0xff]
      %v421 = vld [vmem:[%s5 + $0xe8] sm:$0xff]
      %v422 = vld [vmem:[%s5 + $0xf0] sm:$0xff]
      %v423 = vld [vmem:[%s5 + $0xf8] sm:$0xff]
      %424 = vmatpush.msra.mxu0 %v407
      %425 = vmatpush.msra.mxu0 %v406
      %426 = vmatpush.msra.mxu0 %v405
      %427 = vmatpush.msra.mxu0 %v404
      %428 = vmatpush.msra.mxu0 %v403
      %429 = vmatpush.msra.mxu0 %v402
      %430 = vmatpush.msra.mxu0 %v401
      %431 = vmatpush.msra.mxu0 %v400
      %432 = vmatpush.msra.mxu0 %v399
      %433 = vmatpush.msra.mxu0 %v398
      %434 = vmatpush.msra.mxu0 %v397
      %435 = vmatpush.msra.mxu0 %v396
      %436 = vmatpush.msra.mxu0 %v395
      %437 = vmatpush.msra.mxu0 %v394
      %438 = vmatpush.msra.mxu0 %v393
      %439 = vmatpush.msra.mxu0 %v392
      %440 = vmatmul.f32.gmra.mxu0 %v384
      %v441 = vpop.f32.mrf.mxu0
      %v442 = vadd.f32 0.0, %v441
      %443 = vmatmul.f32.gmra.mxu0 %v386
      %v444 = vpop.f32.mrf.mxu0
      %v445 = vadd.f32 0.0, %v444
      %446 = vmatmul.f32.gmra.mxu0 %v388
      %v447 = vpop.f32.mrf.mxu0
      %v448 = vadd.f32 0.0, %v447
      %449 = vmatmul.f32.gmra.mxu0 %v390
      %v450 = vpop.f32.mrf.mxu0
      %v451 = vadd.f32 0.0, %v450
      %452 = vdwg.mxu0
      %453 = vmatpush.msra.mxu0 %v423
      %454 = vmatpush.msra.mxu0 %v422
      %455 = vmatpush.msra.mxu0 %v421
      %456 = vmatpush.msra.mxu0 %v420
      %457 = vmatpush.msra.mxu0 %v419
      %458 = vmatpush.msra.mxu0 %v418
      %459 = vmatpush.msra.mxu0 %v417
      %460 = vmatpush.msra.mxu0 %v416
      %461 = vmatpush.msra.mxu0 %v415
      %462 = vmatpush.msra.mxu0 %v414
      %463 = vmatpush.msra.mxu0 %v413
      %464 = vmatpush.msra.mxu0 %v412
      %465 = vmatpush.msra.mxu0 %v411
      %466 = vmatpush.msra.mxu0 %v410
      %467 = vmatpush.msra.mxu0 %v409
      %468 = vmatpush.msra.mxu0 %v408
      %469 = vmatmul.f32.gmra.mxu0 %v385
      %v470 = vpop.f32.mrf.mxu0
      %v471 = vadd.f32 %v442, %v470
      %472 = vmatmul.f32.gmra.mxu0 %v387
      %v473 = vpop.f32.mrf.mxu0
      %v474 = vadd.f32 %v445, %v473
      %475 = vmatmul.f32.gmra.mxu0 %v389
      %v476 = vpop.f32.mrf.mxu0
      %v477 = vadd.f32 %v448, %v476
      %478 = vmatmul.f32.gmra.mxu0 %v391
      %v479 = vpop.f32.mrf.mxu0
      %v480 = vadd.f32 %v451, %v479
      %481 = vdwg.mxu0
      %482 = vxpose.xlu0.b32.start [1/16] %v471, 128
      %483 = vxpose.xlu0.b32.cont [2/16] %v474, 128
      %484 = vxpose.xlu0.b32.cont [3/16] 0.0, 128
      %485 = vxpose.xlu0.b32.cont [4/16] 0.0, 128
      %486 = vxpose.xlu0.b32.cont [5/16] 0.0, 128
      %487 = vxpose.xlu0.b32.cont [6/16] 0.0, 128
      %488 = vxpose.xlu0.b32.cont [7/16] 0.0, 128
      %489 = vxpose.xlu0.b32.cont [8/16] 0.0, 128
      %490 = vxpose.xlu0.b32.cont [9/16] 0.0, 128
      %491 = vxpose.xlu0.b32.cont [10/16] 0.0, 128
      %492 = vxpose.xlu0.b32.cont [11/16] 0.0, 128
      %493 = vxpose.xlu0.b32.cont [12/16] 0.0, 128
      %494 = vxpose.xlu0.b32.cont [13/16] 0.0, 128
      %495 = vxpose.xlu0.b32.cont [14/16] 0.0, 128
      %496 = vxpose.xlu0.b32.cont [15/16] 0.0, 128
      %497 = vxpose.xlu0.b32.end [16/16] 0.0, 128
      %v498 = vpop.trf.xlu0
      %v499 = vpop.trf.xlu0
      %v500 = vpop.trf.xlu0
      %v501 = vpop.trf.xlu0
      %v502 = vpop.trf.xlu0
      %v503 = vpop.trf.xlu0
      %v504 = vpop.trf.xlu0
      %v505 = vpop.trf.xlu0
      %v506 = vpop.trf.xlu0
      %v507 = vpop.trf.xlu0
      %v508 = vpop.trf.xlu0
      %v509 = vpop.trf.xlu0
      %v510 = vpop.trf.xlu0
      %v511 = vpop.trf.xlu0
      %v512 = vpop.trf.xlu0
      %v513 = vpop.trf.xlu0
      %vm514 = vcmask 130048
      %v516 = vsel %vm514, %v498, 0
      %v519 = vsel %vm514, %v499, 0
      %v522 = vsel %vm514, %v500, 0
      %v525 = vsel %vm514, %v501, 0
      %v528 = vsel %vm514, %v502, 0
      %v531 = vsel %vm514, %v503, 0
      %v534 = vsel %vm514, %v504, 0
      %v537 = vsel %vm514, %v505, 0
      %v540 = vsel %vm514, %v506, 0
      %v543 = vsel %vm514, %v507, 0
      %v546 = vsel %vm514, %v508, 0
      %v549 = vsel %vm514, %v509, 0
      %v552 = vsel %vm514, %v510, 0
      %v555 = vsel %vm514, %v511, 0
      %v558 = vsel %vm514, %v512, 0
      %v561 = vsel %vm514, %v513, 0
      %563 = vmatpush.msra.mxu0 0.0
      %564 = vmatpush.msra.mxu0 0.0
      %565 = vmatpush.msra.mxu0 0.0
      %566 = vmatpush.msra.mxu0 0.0
      %567 = vmatpush.msra.mxu0 0.0
      %568 = vmatpush.msra.mxu0 0.0
      %569 = vmatpush.msra.mxu0 0.0
      %570 = vmatpush.msra.mxu0 0.0
      %571 = vmatpush.msra.mxu0 0.0
      %572 = vmatpush.msra.mxu0 0.0
      %573 = vmatpush.msra.mxu0 0.0
      %574 = vmatpush.msra.mxu0 0.0
      %575 = vmatpush.msra.mxu0 0.0
      %576 = vmatpush.msra.mxu0 0.0
      %577 = vmatpush.msra.mxu0 %v386
      %578 = vmatpush.msra.mxu0 %v384
      %579 = vmatmul.f32.gmra.mxu0 %v516
      %v580 = vpop.f32.mrf.mxu0
      %v581 = vadd.f32 0.0, %v580
      %582 = vmatmul.f32.gmra.mxu0 %v519
      %v583 = vpop.f32.mrf.mxu0
      %v584 = vadd.f32 0.0, %v583
      %585 = vmatmul.f32.gmra.mxu0 %v522
      %v586 = vpop.f32.mrf.mxu0
      %v587 = vadd.f32 0.0, %v586
      %588 = vmatmul.f32.gmra.mxu0 %v525
      %v589 = vpop.f32.mrf.mxu0
      %v590 = vadd.f32 0.0, %v589
      %591 = vmatmul.f32.gmra.mxu0 %v528
      %v592 = vpop.f32.mrf.mxu0
      %v593 = vadd.f32 0.0, %v592
      %594 = vmatmul.f32.gmra.mxu0 %v531
      %v595 = vpop.f32.mrf.mxu0
      %v596 = vadd.f32 0.0, %v595
      %597 = vmatmul.f32.gmra.mxu0 %v534
      %v598 = vpop.f32.mrf.mxu0
      %v599 = vadd.f32 0.0, %v598
      %600 = vmatmul.f32.gmra.mxu0 %v537
      %v601 = vpop.f32.mrf.mxu0
      %v602 = vadd.f32 0.0, %v601
      %603 = vmatmul.f32.gmra.mxu0 %v540
      %v604 = vpop.f32.mrf.mxu0
      %v605 = vadd.f32 0.0, %v604
      %606 = vmatmul.f32.gmra.mxu0 %v543
      %v607 = vpop.f32.mrf.mxu0
      %v608 = vadd.f32 0.0, %v607
      %609 = vmatmul.f32.gmra.mxu0 %v546
      %v610 = vpop.f32.mrf.mxu0
      %v611 = vadd.f32 0.0, %v610
      %612 = vmatmul.f32.gmra.mxu0 %v549
      %v613 = vpop.f32.mrf.mxu0
      %v614 = vadd.f32 0.0, %v613
      %615 = vmatmul.f32.gmra.mxu0 %v552
      %v616 = vpop.f32.mrf.mxu0
      %v617 = vadd.f32 0.0, %v616
      %618 = vmatmul.f32.gmra.mxu0 %v555
      %v619 = vpop.f32.mrf.mxu0
      %v620 = vadd.f32 0.0, %v619
      %621 = vmatmul.f32.gmra.mxu0 %v558
      %v622 = vpop.f32.mrf.mxu0
      %v623 = vadd.f32 0.0, %v622
      %624 = vmatmul.f32.gmra.mxu0 %v561
      %v625 = vpop.f32.mrf.mxu0
      %v626 = vadd.f32 0.0, %v625
      %627 = vdwg.mxu0
      %628 = vmatpush.msra.mxu0 0.0
      %629 = vmatpush.msra.mxu0 0.0
      %630 = vmatpush.msra.mxu0 0.0
      %631 = vmatpush.msra.mxu0 0.0
      %632 = vmatpush.msra.mxu0 0.0
      %633 = vmatpush.msra.mxu0 0.0
      %634 = vmatpush.msra.mxu0 0.0
      %635 = vmatpush.msra.mxu0 0.0
      %636 = vmatpush.msra.mxu0 0.0
      %637 = vmatpush.msra.mxu0 0.0
      %638 = vmatpush.msra.mxu0 0.0
      %639 = vmatpush.msra.mxu0 0.0
      %640 = vmatpush.msra.mxu0 0.0
      %641 = vmatpush.msra.mxu0 0.0
      %642 = vmatpush.msra.mxu0 %v387
      %643 = vmatpush.msra.mxu0 %v385
      %644 = vmatmul.f32.gmra.mxu0 %v516
      %v645 = vpop.f32.mrf.mxu0
      %v646 = vadd.f32 0.0, %v645
      %647 = vmatmul.f32.gmra.mxu0 %v519
      %v648 = vpop.f32.mrf.mxu0
      %v649 = vadd.f32 0.0, %v648
      %650 = vmatmul.f32.gmra.mxu0 %v522
      %v651 = vpop.f32.mrf.mxu0
      %v652 = vadd.f32 0.0, %v651
      %653 = vmatmul.f32.gmra.mxu0 %v525
      %v654 = vpop.f32.mrf.mxu0
      %v655 = vadd.f32 0.0, %v654
      %656 = vmatmul.f32.gmra.mxu0 %v528
      %v657 = vpop.f32.mrf.mxu0
      %v658 = vadd.f32 0.0, %v657
      %659 = vmatmul.f32.gmra.mxu0 %v531
      %v660 = vpop.f32.mrf.mxu0
      %v661 = vadd.f32 0.0, %v660
      %662 = vmatmul.f32.gmra.mxu0 %v534
      %v663 = vpop.f32.mrf.mxu0
      %v664 = vadd.f32 0.0, %v663
      %665 = vmatmul.f32.gmra.mxu0 %v537
      %v666 = vpop.f32.mrf.mxu0
      %v667 = vadd.f32 0.0, %v666
      %668 = vmatmul.f32.gmra.mxu0 %v540
      %v669 = vpop.f32.mrf.mxu0
      %v670 = vadd.f32 0.0, %v669
      %671 = vmatmul.f32.gmra.mxu0 %v543
      %v672 = vpop.f32.mrf.mxu0
      %v673 = vadd.f32 0.0, %v672
      %674 = vmatmul.f32.gmra.mxu0 %v546
      %v675 = vpop.f32.mrf.mxu0
      %v676 = vadd.f32 0.0, %v675
      %677 = vmatmul.f32.gmra.mxu0 %v549
      %v678 = vpop.f32.mrf.mxu0
      %v679 = vadd.f32 0.0, %v678
      %680 = vmatmul.f32.gmra.mxu0 %v552
      %v681 = vpop.f32.mrf.mxu0
      %v682 = vadd.f32 0.0, %v681
      %683 = vmatmul.f32.gmra.mxu0 %v555
      %v684 = vpop.f32.mrf.mxu0
      %v685 = vadd.f32 0.0, %v684
      %686 = vmatmul.f32.gmra.mxu0 %v558
      %v687 = vpop.f32.mrf.mxu0
      %v688 = vadd.f32 0.0, %v687
      %689 = vmatmul.f32.gmra.mxu0 %v561
      %v690 = vpop.f32.mrf.mxu0
      %v691 = vadd.f32 0.0, %v690
      %692 = vdwg.mxu0
      %v693 = vmul.f32 %v581, 0.25
      %v694 = vmul.f32 %v646, 0.25
      %v695 = vmul.f32 %v584, 0.25
      %v696 = vmul.f32 %v649, 0.25
      %v697 = vmul.f32 %v587, 0.25
      %v698 = vmul.f32 %v652, 0.25
      %v699 = vmul.f32 %v590, 0.25
      %v700 = vmul.f32 %v655, 0.25
      %v701 = vmul.f32 %v593, 0.25
      %v702 = vmul.f32 %v658, 0.25
      %v703 = vmul.f32 %v596, 0.25
      %v704 = vmul.f32 %v661, 0.25
      %v705 = vmul.f32 %v599, 0.25
      %v706 = vmul.f32 %v664, 0.25
      %v707 = vmul.f32 %v602, 0.25
      %v708 = vmul.f32 %v667, 0.25
      %v709 = vmul.f32 %v605, 0.25
      %v710 = vmul.f32 %v670, 0.25
      %v711 = vmul.f32 %v608, 0.25
      %v712 = vmul.f32 %v673, 0.25
      %v713 = vmul.f32 %v611, 0.25
      %v714 = vmul.f32 %v676, 0.25
      %v715 = vmul.f32 %v614, 0.25
      %v716 = vmul.f32 %v679, 0.25
      %v717 = vmul.f32 %v617, 0.25
      %v718 = vmul.f32 %v682, 0.25
      %v719 = vmul.f32 %v620, 0.25
      %v720 = vmul.f32 %v685, 0.25
      %v721 = vmul.f32 %v623, 0.25
      %v722 = vmul.f32 %v688, 0.25
      %v723 = vmul.f32 %v626, 0.25
      %v724 = vmul.f32 %v691, 0.25
      %v725 = vadd.s32 %v360, 32
      %v726 = vadd.s32 %v360, 40
      %v727 = vadd.s32 %v360, 48
      %v728 = vadd.s32 %v360, 56
      %v729 = vadd.s32 %v360, 64
      %v730 = vadd.s32 %v360, 72
      %v731 = vadd.s32 %v360, 80
      %v732 = vadd.s32 %v360, 88
      %v733 = vadd.s32 %v360, 96
      %v734 = vadd.s32 %v360, 104
      %v735 = vadd.s32 %v360, 112
      %v736 = vadd.s32 %v360, 120
      %vm737 = vcmp.lt.s32.totalorder %v360, 110
      %vm738 = vcmp.lt.s32.totalorder %v361, 110
      %vm739 = vcmp.lt.s32.totalorder %v362, 110
      %vm740 = vcmp.lt.s32.totalorder %v363, 110
      %vm741 = vcmp.lt.s32.totalorder %v725, 110
      %vm742 = vcmp.lt.s32.totalorder %v726, 110
      %vm743 = vcmp.lt.s32.totalorder %v727, 110
      %vm744 = vcmp.lt.s32.totalorder %v728, 110
      %vm745 = vcmp.lt.s32.totalorder %v729, 110
      %vm746 = vcmp.lt.s32.totalorder %v730, 110
      %vm747 = vcmp.lt.s32.totalorder %v731, 110
      %vm748 = vcmp.lt.s32.totalorder %v732, 110
      %vm749 = vcmp.lt.s32.totalorder %v733, 110
      %vm750 = vcmp.lt.s32.totalorder %v734, 110
      %vm751 = vcmp.lt.s32.totalorder %v735, 110
      %vm752 = vcmp.lt.s32.totalorder %v736, 110
      %v753 = vsel %vm737, 1, 0
      %v754 = vsel %vm738, 1, 0
      %v755 = vsel %vm739, 1, 0
      %v756 = vsel %vm740, 1, 0
      %v757 = vsel %vm741, 1, 0
      %v758 = vsel %vm742, 1, 0
      %v759 = vsel %vm743, 1, 0
      %v760 = vsel %vm744, 1, 0
      %v761 = vsel %vm745, 1, 0
      %v762 = vsel %vm746, 1, 0
      %v763 = vsel %vm747, 1, 0
      %v764 = vsel %vm748, 1, 0
      %v765 = vsel %vm749, 1, 0
      %v766 = vsel %vm750, 1, 0
      %v767 = vsel %vm751, 1, 0
      %v768 = vsel %vm752, 1, 0
      %vm769 = vcmp.eq.s32.totalorder %v753, 1
      %vm770 = vcmp.eq.s32.totalorder %v754, 1
      %vm771 = vcmp.eq.s32.totalorder %v755, 1
      %vm772 = vcmp.eq.s32.totalorder %v756, 1
      %vm773 = vcmp.eq.s32.totalorder %v757, 1
      %vm774 = vcmp.eq.s32.totalorder %v758, 1
      %vm775 = vcmp.eq.s32.totalorder %v759, 1
      %vm776 = vcmp.eq.s32.totalorder %v760, 1
      %vm777 = vcmp.eq.s32.totalorder %v761, 1
      %vm778 = vcmp.eq.s32.totalorder %v762, 1
      %vm779 = vcmp.eq.s32.totalorder %v763, 1
      %vm780 = vcmp.eq.s32.totalorder %v764, 1
      %vm781 = vcmp.eq.s32.totalorder %v765, 1
      %vm782 = vcmp.eq.s32.totalorder %v766, 1
      %vm783 = vcmp.eq.s32.totalorder %v767, 1
      %vm784 = vcmp.eq.s32.totalorder %v768, 1
      %v785 = vsel %vm769, %v693, -1e+30
      %v786 = vsel %vm769, %v694, -1e+30
      %v787 = vsel %vm770, %v695, -1e+30
      %v788 = vsel %vm770, %v696, -1e+30
      %v789 = vsel %vm771, %v697, -1e+30
      %v790 = vsel %vm771, %v698, -1e+30
      %v791 = vsel %vm772, %v699, -1e+30
      %v792 = vsel %vm772, %v700, -1e+30
      %v793 = vsel %vm773, %v701, -1e+30
      %v794 = vsel %vm773, %v702, -1e+30
      %v795 = vsel %vm774, %v703, -1e+30
      %v796 = vsel %vm774, %v704, -1e+30
      %v797 = vsel %vm775, %v705, -1e+30
      %v798 = vsel %vm775, %v706, -1e+30
      %v799 = vsel %vm776, %v707, -1e+30
      %v800 = vsel %vm776, %v708, -1e+30
      %v801 = vsel %vm777, %v709, -1e+30
      %v802 = vsel %vm777, %v710, -1e+30
      %v803 = vsel %vm778, %v711, -1e+30
      %v804 = vsel %vm778, %v712, -1e+30
      %v805 = vsel %vm779, %v713, -1e+30
      %v806 = vsel %vm779, %v714, -1e+30
      %v807 = vsel %vm780, %v715, -1e+30
      %v808 = vsel %vm780, %v716, -1e+30
      %v809 = vsel %vm781, %v717, -1e+30
      %v810 = vsel %vm781, %v718, -1e+30
      %v811 = vsel %vm782, %v719, -1e+30
      %v812 = vsel %vm782, %v720, -1e+30
      %v813 = vsel %vm783, %v721, -1e+30
      %v814 = vsel %vm783, %v722, -1e+30
      %v815 = vsel %vm784, %v723, -1e+30
      %v816 = vsel %vm784, %v724, -1e+30
      %v817 = vmax.f32 %v785, %v789
      %v818 = vmax.f32 %v787, %v791
      %v819 = vmax.f32 %v817, %v793
      %v820 = vmax.f32 %v818, %v795
      %v821 = vmax.f32 %v819, %v797
      %v822 = vmax.f32 %v820, %v799
      %v823 = vmax.f32 %v821, %v801
      %v824 = vmax.f32 %v822, %v803
      %v825 = vmax.f32 %v823, %v805
      %v826 = vmax.f32 %v824, %v807
      %v827 = vmax.f32 %v825, %v809
      %v828 = vmax.f32 %v826, %v811
      %v829 = vmax.f32 %v827, %v813
      %v830 = vmax.f32 %v828, %v815
      %v831 = vmax.f32 %v829, %v830
      %v832 = vrot.slane %v831, 4
      %v833 = vmax.f32 %v831, %v832
      %v834 = vrot.slane %v833, 2
      %v835 = vmax.f32 %v833, %v834
      %v836 = vrot.slane %v835, 1
      %v837 = vmax.f32 %v835, %v836
      %v838 = vmax.f32 %v786, %v790
      %v839 = vmax.f32 %v788, %v792
      %v840 = vmax.f32 %v838, %v794
      %v841 = vmax.f32 %v839, %v796
      %v842 = vmax.f32 %v840, %v798
      %v843 = vmax.f32 %v841, %v800
      %v844 = vmax.f32 %v842, %v802
      %v845 = vmax.f32 %v843, %v804
      %v846 = vmax.f32 %v844, %v806
      %v847 = vmax.f32 %v845, %v808
      %v848 = vmax.f32 %v846, %v810
      %v849 = vmax.f32 %v847, %v812
      %v850 = vmax.f32 %v848, %v814
      %v851 = vmax.f32 %v849, %v816
      %v852 = vmax.f32 %v850, %v851
      %v853 = vrot.slane %v852, 4
      %v854 = vmax.f32 %v852, %v853
      %v855 = vrot.slane %v854, 2
      %v856 = vmax.f32 %v854, %v855
      %v857 = vrot.slane %v856, 1
      %v858 = vmax.f32 %v856, %v857
      %v859 = vsub.f32 %v785, %v837
      %v860 = vsub.f32 %v786, %v858
      %v861 = vsub.f32 %v787, %v837
      %v862 = vsub.f32 %v788, %v858
      %v863 = vsub.f32 %v789, %v837
      %v864 = vsub.f32 %v790, %v858
      %v865 = vsub.f32 %v791, %v837
      %v866 = vsub.f32 %v792, %v858
      %v867 = vsub.f32 %v793, %v837
      %v868 = vsub.f32 %v794, %v858
      %v869 = vsub.f32 %v795, %v837
      %v870 = vsub.f32 %v796, %v858
      %v871 = vsub.f32 %v797, %v837
      %v872 = vsub.f32 %v798, %v858
      %v873 = vsub.f32 %v799, %v837
      %v874 = vsub.f32 %v800, %v858
      %v875 = vsub.f32 %v801, %v837
      %v876 = vsub.f32 %v802, %v858
      %v877 = vsub.f32 %v803, %v837
      %v878 = vsub.f32 %v804, %v858
      %v879 = vsub.f32 %v805, %v837
      %v880 = vsub.f32 %v806, %v858
      %v881 = vsub.f32 %v807, %v837
      %v882 = vsub.f32 %v808, %v858
      %v883 = vsub.f32 %v809, %v837
      %v884 = vsub.f32 %v810, %v858
      %v885 = vsub.f32 %v811, %v837
      %v886 = vsub.f32 %v812, %v858
      %v887 = vsub.f32 %v813, %v837
      %v888 = vsub.f32 %v814, %v858
      %v889 = vsub.f32 %v815, %v837
      %v890 = vsub.f32 %v816, %v858
      %v891 = vmul.f32 %v859, 1.442695
      %v892 = vpow.pop %v891
      %v893 = vmul.f32 %v860, 1.442695
      %v894 = vpow.pop %v893
      %v895 = vmul.f32 %v861, 1.442695
      %v896 = vpow.pop %v895
      %v897 = vmul.f32 %v862, 1.442695
      %v898 = vpow.pop %v897
      %v899 = vmul.f32 %v863, 1.442695
      %v900 = vpow.pop %v899
      %v901 = vmul.f32 %v864, 1.442695
      %v902 = vpow.pop %v901
      %v903 = vmul.f32 %v865, 1.442695
      %v904 = vpow.pop %v903
      %v905 = vmul.f32 %v866, 1.442695
      %v906 = vpow.pop %v905
      %v907 = vmul.f32 %v867, 1.442695
      %v908 = vpow.pop %v907
      %v909 = vmul.f32 %v868, 1.442695
      %v910 = vpow.pop %v909
      %v911 = vmul.f32 %v869, 1.442695
      %v912 = vpow.pop %v911
      %v913 = vmul.f32 %v870, 1.442695
      %v914 = vpow.pop %v913
      %v915 = vmul.f32 %v871, 1.442695
      %v916 = vpow.pop %v915
      %v917 = vmul.f32 %v872, 1.442695
      %v918 = vpow.pop %v917
      %v919 = vmul.f32 %v873, 1.442695
      %v920 = vpow.pop %v919
      %v921 = vmul.f32 %v874, 1.442695
      %v922 = vpow.pop %v921
      %v923 = vmul.f32 %v875, 1.442695
      %v924 = vpow.pop %v923
      %v925 = vmul.f32 %v876, 1.442695
      %v926 = vpow.pop %v925
      %v927 = vmul.f32 %v877, 1.442695
      %v928 = vpow.pop %v927
      %v929 = vmul.f32 %v878, 1.442695
      %v930 = vpow.pop %v929
      %v931 = vmul.f32 %v879, 1.442695
      %v932 = vpow.pop %v931
      %v933 = vmul.f32 %v880, 1.442695
      %v934 = vpow.pop %v933
      %v935 = vmul.f32 %v881, 1.442695
      %v936 = vpow.pop %v935
      %v937 = vmul.f32 %v882, 1.442695
      %v938 = vpow.pop %v937
      %v939 = vmul.f32 %v883, 1.442695
      %v940 = vpow.pop %v939
      %v941 = vmul.f32 %v884, 1.442695
      %v942 = vpow.pop %v941
      %v943 = vmul.f32 %v885, 1.442695
      %v944 = vpow.pop %v943
      %v945 = vmul.f32 %v886, 1.442695
      %v946 = vpow.pop %v945
      %v947 = vmul.f32 %v887, 1.442695
      %v948 = vpow.pop %v947
      %v949 = vmul.f32 %v888, 1.442695
      %v950 = vpow.pop %v949
      %v951 = vmul.f32 %v889, 1.442695
      %v952 = vpow.pop %v951
      %v953 = vmul.f32 %v890, 1.442695
      %v954 = vpow.pop %v953
      %v955 = vadd.f32 %v892, %v896
      %v956 = vadd.f32 %v955, %v900
      %v957 = vadd.f32 %v956, %v904
      %v958 = vadd.f32 %v957, %v908
      %v959 = vadd.f32 %v958, %v912
      %v960 = vadd.f32 %v959, %v916
      %v961 = vadd.f32 %v960, %v920
      %v962 = vadd.f32 %v961, %v924
      %v963 = vadd.f32 %v962, %v928
      %v964 = vadd.f32 %v963, %v932
      %v965 = vadd.f32 %v964, %v936
      %v966 = vadd.f32 %v965, %v940
      %v967 = vadd.f32 %v966, %v944
      %v968 = vadd.f32 %v967, %v948
      %v969 = vadd.f32 %v968, %v952
      %v970 = vrot.slane %v969, 4
      %v971 = vadd.f32 %v969, %v970
      %v972 = vrot.slane %v971, 2
      %v973 = vadd.f32 %v971, %v972
      %v974 = vrot.slane %v973, 1
      %v975 = vadd.f32 %v973, %v974
      %v976 = vadd.f32 %v894, %v898
      %v977 = vadd.f32 %v976, %v902
      %v978 = vadd.f32 %v977, %v906
      %v979 = vadd.f32 %v978, %v910
      %v980 = vadd.f32 %v979, %v914
      %v981 = vadd.f32 %v980, %v918
      %v982 = vadd.f32 %v981, %v922
      %v983 = vadd.f32 %v982, %v926
      %v984 = vadd.f32 %v983, %v930
      %v985 = vadd.f32 %v984, %v934
      %v986 = vadd.f32 %v985, %v938
      %v987 = vadd.f32 %v986, %v942
      %v988 = vadd.f32 %v987, %v946
      %v989 = vadd.f32 %v988, %v950
      %v990 = vadd.f32 %v989, %v954
      %v991 = vrot.slane %v990, 4
      %v992 = vadd.f32 %v990, %v991
      %v993 = vrot.slane %v992, 2
      %v994 = vadd.f32 %v992, %v993
      %v995 = vrot.slane %v994, 1
      %v996 = vadd.f32 %v994, %v995
      %v997 = vrcp.pop %v975
      %v998 = vmul.f32 %v975, %v997
      %v999 = vsub.f32 1.0, %v998
      %v1000 = vmul.f32 %v997, %v999
      %v1001 = vadd.f32 %v997, %v1000
      %vm1002 = vweird.f32 %v975
      %vm1003 = vweird.f32 %v997
      %vm1004 = vmor %vm1002, %vm1003
      %v1005 = vsel %vm1004, %v997, %v1001
      %v1006 = vand.u32 2147483647, %v975
      %vm1007 = vcmp.eq.f32.partialorder %v1006, 8.507059e+37
      %v1008 = vand.u32 %v975, 2147483648
      %v1009 = vor.u32 1.1754944e-38, %v1008
      %v1010 = vsel %vm1007, %v1009, %v1005
      %v1011 = vrcp.pop %v996
      %v1012 = vmul.f32 %v996, %v1011
      %v1013 = vsub.f32 1.0, %v1012
      %v1014 = vmul.f32 %v1011, %v1013
      %v1015 = vadd.f32 %v1011, %v1014
      %vm1016 = vweird.f32 %v996
      %vm1017 = vweird.f32 %v1011
      %vm1018 = vmor %vm1016, %vm1017
      %v1019 = vsel %vm1018, %v1011, %v1015
      %v1020 = vand.u32 2147483647, %v996
      %vm1021 = vcmp.eq.f32.partialorder %v1020, 8.507059e+37
      %v1022 = vand.u32 %v996, 2147483648
      %v1023 = vor.u32 1.1754944e-38, %v1022
      %v1024 = vsel %vm1021, %v1023, %v1019
      %v1025 = vmul.f32 %v892, %v1010
      %v1026 = vmul.f32 %v894, %v1024
      %v1027 = vmul.f32 %v896, %v1010
      %v1028 = vmul.f32 %v898, %v1024
      %v1029 = vmul.f32 %v900, %v1010
      %v1030 = vmul.f32 %v902, %v1024
      %v1031 = vmul.f32 %v904, %v1010
      %v1032 = vmul.f32 %v906, %v1024
      %v1033 = vmul.f32 %v908, %v1010
      %v1034 = vmul.f32 %v910, %v1024
      %v1035 = vmul.f32 %v912, %v1010
      %v1036 = vmul.f32 %v914, %v1024
      %v1037 = vmul.f32 %v916, %v1010
      %v1038 = vmul.f32 %v918, %v1024
      %v1039 = vmul.f32 %v920, %v1010
      %v1040 = vmul.f32 %v922, %v1024
      %v1041 = vmul.f32 %v924, %v1010
      %v1042 = vmul.f32 %v926, %v1024
      %v1043 = vmul.f32 %v928, %v1010
      %v1044 = vmul.f32 %v930, %v1024
      %v1045 = vmul.f32 %v932, %v1010
      %v1046 = vmul.f32 %v934, %v1024
      %v1047 = vmul.f32 %v936, %v1010
      %v1048 = vmul.f32 %v938, %v1024
      %v1049 = vmul.f32 %v940, %v1010
      %v1050 = vmul.f32 %v942, %v1024
      %v1051 = vmul.f32 %v944, %v1010
      %v1052 = vmul.f32 %v946, %v1024
      %v1053 = vmul.f32 %v948, %v1010
      %v1054 = vmul.f32 %v950, %v1024
      %v1055 = vmul.f32 %v952, %v1010
      %v1056 = vmul.f32 %v954, %v1024
      %1057 = vmatpush.msra.mxu0 %v1055
      %1058 = vmatpush.msra.mxu0 %v1053
      %1059 = vmatpush.msra.mxu0 %v1051
      %1060 = vmatpush.msra.mxu0 %v1049
      %1061 = vmatpush.msra.mxu0 %v1047
      %1062 = vmatpush.msra.mxu0 %v1045
      %1063 = vmatpush.msra.mxu0 %v1043
      %1064 = vmatpush.msra.mxu0 %v1041
      %1065 = vmatpush.msra.mxu0 %v1039
      %1066 = vmatpush.msra.mxu0 %v1037
      %1067 = vmatpush.msra.mxu0 %v1035
      %1068 = vmatpush.msra.mxu0 %v1033
      %1069 = vmatpush.msra.mxu0 %v1031
      %1070 = vmatpush.msra.mxu0 %v1029
      %1071 = vmatpush.msra.mxu0 %v1027
      %1072 = vmatpush.msra.mxu0 %v1025
      %1073 = vmatmul.f32.gmra.mxu0 %v477
      %v1074 = vpop.f32.mrf.mxu0
      %v1075 = vadd.f32 0.0, %v1074
      %1076 = vmatmul.f32.gmra.mxu0 %v480
      %v1077 = vpop.f32.mrf.mxu0
      %v1078 = vadd.f32 0.0, %v1077
      %1079 = vdwg.mxu0
      %1080 = vmatpush.msra.mxu0 %v1056
      %1081 = vmatpush.msra.mxu0 %v1054
      %1082 = vmatpush.msra.mxu0 %v1052
      %1083 = vmatpush.msra.mxu0 %v1050
      %1084 = vmatpush.msra.mxu0 %v1048
      %1085 = vmatpush.msra.mxu0 %v1046
      %1086 = vmatpush.msra.mxu0 %v1044
      %1087 = vmatpush.msra.mxu0 %v1042
      %1088 = vmatpush.msra.mxu0 %v1040
      %1089 = vmatpush.msra.mxu0 %v1038
      %1090 = vmatpush.msra.mxu0 %v1036
      %1091 = vmatpush.msra.mxu0 %v1034
      %1092 = vmatpush.msra.mxu0 %v1032
      %1093 = vmatpush.msra.mxu0 %v1030
      %1094 = vmatpush.msra.mxu0 %v1028
      %1095 = vmatpush.msra.mxu0 %v1026
      %1096 = vmatmul.f32.gmra.mxu0 %v477
      %v1097 = vpop.f32.mrf.mxu0
      %v1098 = vadd.f32 0.0, %v1097
      %1099 = vmatmul.f32.gmra.mxu0 %v480
      %v1100 = vpop.f32.mrf.mxu0
      %v1101 = vadd.f32 0.0, %v1100
      %1102 = vdwg.mxu0
      %v1103 = vld [vmem:[%s3] sm:$0xff]
      %v1104 = vld [vmem:[%s3 + $0x8] sm:$0xff]
      %v1105 = vld [vmem:[%s3 + $0x10] sm:$0xff]
      %v1106 = vld [vmem:[%s3 + $0x18] sm:$0xff]
      %v1107 = vld [vmem:[%s4] sm:$0xff]
      %v1108 = vld [vmem:[%s4 + $0x8] sm:$0xff]
      %v1109 = vld [vmem:[%s4 + $0x10] sm:$0xff]
      %v1110 = vld [vmem:[%s4 + $0x18] sm:$0xff]
      %1112 = vset.pattern.permute.xlu0 0
      %1113 = vperm.xlu0 %1112, %v1107
      %v1114 = vpop.permute.xlu0 %1113
      %1117 = vset.pattern.permute.xlu0 0
      %1118 = vperm.xlu0 %1117, %v1108
      %v1119 = vpop.permute.xlu0 %1118
      %1122 = vset.pattern.permute.xlu0 0
      %1123 = vperm.xlu0 %1122, %v1109
      %v1124 = vpop.permute.xlu0 %1123
      %1127 = vset.pattern.permute.xlu0 0
      %1128 = vperm.xlu0 %1127, %v1110
      %v1129 = vpop.permute.xlu0 %1128
      %v1132 = vsel %vm514, %v1103, 0
      %v1135 = vsel %vm514, %v1104, 0
      %v1138 = vsel %vm514, %v1105, 0
      %v1141 = vsel %vm514, %v1106, 0
      %1143 = vmatpush.msra.mxu0 0.0
      %1144 = vmatpush.msra.mxu0 0.0
      %1145 = vmatpush.msra.mxu0 0.0
      %1146 = vmatpush.msra.mxu0 0.0
      %1147 = vmatpush.msra.mxu0 0.0
      %1148 = vmatpush.msra.mxu0 0.0
      %1149 = vmatpush.msra.mxu0 0.0
      %1150 = vmatpush.msra.mxu0 0.0
      %1151 = vmatpush.msra.mxu0 0.0
      %1152 = vmatpush.msra.mxu0 0.0
      %1153 = vmatpush.msra.mxu0 0.0
      %1154 = vmatpush.msra.mxu0 0.0
      %1155 = vmatpush.msra.mxu0 0.0
      %1156 = vmatpush.msra.mxu0 0.0
      %1157 = vmatpush.msra.mxu0 %v1078
      %1158 = vmatpush.msra.mxu0 %v1075
      %1159 = vmatmul.f32.gmra.mxu0 %v1132
      %v1160 = vpop.f32.mrf.mxu0
      %v1161 = vadd.f32 %v1114, %v1160
      %1162 = vmatmul.f32.gmra.mxu0 %v1135
      %v1163 = vpop.f32.mrf.mxu0
      %v1164 = vadd.f32 %v1119, %v1163
      %1165 = vmatmul.f32.gmra.mxu0 %v1138
      %v1166 = vpop.f32.mrf.mxu0
      %v1167 = vadd.f32 %v1124, %v1166
      %1168 = vmatmul.f32.gmra.mxu0 %v1141
      %v1169 = vpop.f32.mrf.mxu0
      %v1170 = vadd.f32 %v1129, %v1169
      %1171 = vdwg.mxu0
      %1172 = vmatpush.msra.mxu0 0.0
      %1173 = vmatpush.msra.mxu0 0.0
      %1174 = vmatpush.msra.mxu0 0.0
      %1175 = vmatpush.msra.mxu0 0.0
      %1176 = vmatpush.msra.mxu0 0.0
      %1177 = vmatpush.msra.mxu0 0.0
      %1178 = vmatpush.msra.mxu0 0.0
      %1179 = vmatpush.msra.mxu0 0.0
      %1180 = vmatpush.msra.mxu0 0.0
      %1181 = vmatpush.msra.mxu0 0.0
      %1182 = vmatpush.msra.mxu0 0.0
      %1183 = vmatpush.msra.mxu0 0.0
      %1184 = vmatpush.msra.mxu0 0.0
      %1185 = vmatpush.msra.mxu0 0.0
      %1186 = vmatpush.msra.mxu0 %v1101
      %1187 = vmatpush.msra.mxu0 %v1098
      %1188 = vmatmul.f32.gmra.mxu0 %v1132
      %v1189 = vpop.f32.mrf.mxu0
      %v1190 = vadd.f32 %v1114, %v1189
      %1191 = vmatmul.f32.gmra.mxu0 %v1135
      %v1192 = vpop.f32.mrf.mxu0
      %v1193 = vadd.f32 %v1119, %v1192
      %1194 = vmatmul.f32.gmra.mxu0 %v1138
      %v1195 = vpop.f32.mrf.mxu0
      %v1196 = vadd.f32 %v1124, %v1195
      %1197 = vmatmul.f32.gmra.mxu0 %v1141
      %v1198 = vpop.f32.mrf.mxu0
      %v1199 = vadd.f32 %v1129, %v1198
      %1200 = vdwg.mxu0
      %1201 = vst [vmem:[%s251] sm:$0xff] %v1161
      %1202 = vst [vmem:[%s251 + $0x8] sm:$0xff] %v1190
      %1203 = vst [vmem:[%s251 + $0x10] sm:$0xff] %v1164
      %1204 = vst [vmem:[%s251 + $0x18] sm:$0xff] %v1193
      %1205 = vst [vmem:[%s251 + $0x20] sm:$0xff] %v1167
      %1206 = vst [vmem:[%s251 + $0x28] sm:$0xff] %v1196
      %1207 = vst [vmem:[%s251 + $0x30] sm:$0xff] %v1170
      %1208 = vst [vmem:[%s251 + $0x38] sm:$0xff] %v1199
      %p1209 = scmp.lt.s32.totalorder %s17, 1
      %s1210 = scalar_select %p1209, %s17, 1
      %s1211 = smul.addr %s1210, 8
      %s1212 = smul.addr %s1211, 8
      %s1213 = scalar_lea.vmem %s6, %s1212
      // Predicated region
      $region45: #{self_attention_block.1} parent=43 // pred_check
        %p1214 = pneg %p166
      $region46: #{self_attention_block.1} parent=43 // pred_check_branch
        %1216 = sbr.rel (%p1214) target = $region48
      $region47: #{self_attention_block.1} parent=43 // pred_region
        _
      $region48: #{self_attention_block.1} parent=43 // pred_fallthru
        _
    $region44: #{self_attention_block.1} parent=5 // pred_fallthru
      _
    %p1217 = scmp.le.s32.totalorder 2, %s12
    // Predicated region
    $region49: #{self_attention_block.1} parent=5 // pred_check
      %p1218 = pneg %p1217
    $region50: #{self_attention_block.1} parent=5 // pred_check_branch
      %1220 = sbr.rel (%p1218) target = $region52
    $region51: #{self_attention_block.1} parent=5 // pred_region
      %s1221 = ssub.s32 %s12, 2
      // Predicated region
      $region53: #{self_attention_block.1} parent=51 // pred_check
        %p1222 = pneg %p172
      $region54: #{self_attention_block.1} parent=51 // pred_check_branch
        %1224 = sbr.rel (%p1222) target = $region56
      $region55: #{self_attention_block.1} parent=51 // pred_region
        %p1225 = scmp.lt.s32.totalorder %s18, 1
        %s1226 = scalar_select %p1225, %s18, 1
        %s1227 = smul.addr %s1226, 8
        %s1228 = smul.addr %s1227, 8
        %s1229 = scalar_lea.vmem %s6, %s1228
      $region56: #{self_attention_block.1} parent=51 // pred_fallthru
        _
    $region52: #{self_attention_block.1} parent=5 // pred_fallthru
      _
  $region6: #{self_attention_block.1} parent=0 // loop_footer
    %s16 = sadd.s32 1, %s12
  $region7: #{self_attention_block.1} parent=0 // loop_footer_branch
    %11 = sbr.rel target = $region3
  $region8: #{self_attention_block.1} parent=0 // loop_exit
    _

</llo_original>
